<compile_context>
chip_gen: v5e
topology: v5e:2x2
jax: 0.10.0
libtpu: 0.0.40
codegen_flags: <defaults>
</compile_context>

<pallas_src>
import jax
import jax.numpy as jnp
import numpy as np
from jax.experimental import pallas as pl
from jax.experimental.pallas import tpu as pltpu


# --------------------------------- kernel -----------------------------------
def _leaky(y):
    return jnp.where(y > 0, y, 0.2 * y)                 # LeakyReLU(0.2), f32 epilogue


def _gemm(y, t_ref):
    t = t_ref[...]
    # If the packed matrices are bf16, cast activations to match (f32 accumulate).
    return jnp.dot(y.astype(t.dtype), t, preferred_element_type=jnp.float32)


def _decoder_kernel(x_ref, t1_ref, t2_ref, t3_ref, t4_ref, t5_ref, o_ref):
    y = x_ref[...].astype(jnp.float32)                  # (B, C0*L0), batch on M dim
    y = _leaky(_gemm(y, t1_ref))                        # ConvT1d(k2,s1,p0) + LeakyReLU
    y = _leaky(_gemm(y, t2_ref))                        # up2 + Conv1d(k3,p1) + LeakyReLU
    y = _leaky(_gemm(y, t3_ref))
    y = _leaky(_gemm(y, t4_ref))
    y = jnp.tanh(_gemm(y, t5_ref))                      # up2 + Conv1d(k3,p1) + Tanh
    o_ref[...] = y.astype(o_ref.dtype)                  # lane-dense (B, Cout*Lf) store


# ------------------------------ host packing ---------------------------------
def pack_decoder_params(params, L, dtype=jnp.float32):
    """One-time (outside jit) folding of pad/upsample/tap-shift + conv weights
    into one dense (Cin*Lin, Cout*Lout) matrix per layer, for input length L.

    Flatten order is channel-major on both sides, matching x.reshape(N, C*L)
    and out.reshape(N, Cout, Lf) in the wrapper.
    """
    def pad1_sel(Lin):                                   # zero-pad 1 each side
        S = np.zeros((Lin, Lin + 2), np.float32)
        S[np.arange(Lin), np.arange(Lin) + 1] = 1.0
        return S

    def up2_pad1_sel(Lin):                               # nearest-2x upsample + pad 1
        S = np.zeros((Lin, 2 * Lin + 2), np.float32)
        idx = np.arange(Lin)
        S[idx, 2 * idx + 1] = 1.0
        S[idx, 2 * idx + 2] = 1.0
        return S

    def fold(S, W):
        # S: (Lin, Lp) 0/1 selection, W: (Cout, Cin, K) correlation weights.
        # y[o, j] = sum_{c,k} W[o,c,k] * xp[c, j+k],  xp[c, m] = sum_i S[i, m] x[c, i]
        # => T[(c,i),(o,j)] = sum_k W[o,c,k] * S[i, j+k]
        Lin, Lp = S.shape
        Cout, Cin, K = W.shape
        Lout = Lp - K + 1
        Sk = np.stack([S[:, k:k + Lout] for k in range(K)], axis=0)  # (K, Lin, Lout)
        T = np.einsum("ock,kij->cioj", W, Sk).reshape(Cin * Lin, Cout * Lout)
        return jnp.asarray(T, dtype)

    # ConvTranspose1d(k=2, s=1, p=0) == pad-1 correlation with flipped taps.
    # PyTorch ConvT weight (Cin, Cout, K) -> correlation weight (Cout, Cin, K).
    w1 = np.asarray(params["w1_t"], np.float32)
    w1_corr = np.transpose(w1[:, :, ::-1], (1, 0, 2))
    w2 = np.asarray(params["w2_t"], np.float32)
    w3 = np.asarray(params["w3_t"], np.float32)
    w4 = np.asarray(params["w4_t"], np.float32)
    w5 = np.asarray(params["w5_t"], np.float32)

    T1 = fold(pad1_sel(L), w1_corr)
    L1 = L + 1
    T2 = fold(up2_pad1_sel(L1), w2)
    L2 = 2 * L1
    T3 = fold(up2_pad1_sel(L2), w3)
    L3 = 2 * L2
    T4 = fold(up2_pad1_sel(L3), w4)
    L4 = 2 * L3
    T5 = fold(up2_pad1_sel(L4), w5)
    return (T1, T2, T3, T4, T5)


# ------------------------------ host wrapper ---------------------------------
def decoder_forward(x_ncl, packed):
    """Fused Decoder forward. Input/output in PyTorch NCL layout."""
    N, Cin, L = x_ncl.shape
    t1, t2, t3, t4, t5 = packed
    assert t1.shape[0] == Cin * L, "packed params were built for a different input length"
    Dout = t5.shape[1]                    # Cout * Lf  (lane-dense output slab width)
    Cout = 2                              # conv5 output channels (fixed by the module)
    Lf = Dout // Cout

    x_flat = x_ncl.reshape(N, Cin * L)    # channel-major flatten (matches T packing)

    # Batch-blocked grid: >=2 "parallel" blocks so v7x's two TensorCores both get
    # work, but only when the per-block batch stays sublane-aligned (multiple of 8).
    # Otherwise one full-batch block (block shape == full dims is always legal).
    if N % 2 == 0 and (N // 2) % 8 == 0:
        G, B = 2, N // 2
    else:
        G, B = 1, N

    def full_spec(w):
        return pl.BlockSpec(w.shape, lambda n: (0, 0))

    out_flat = pl.pallas_call(
        _decoder_kernel,
        out_shape=jax.ShapeDtypeStruct((N, Dout), x_ncl.dtype),
        grid=(G,),
        in_specs=[
            pl.BlockSpec((B, Cin * L), lambda n: (n, 0)),
            full_spec(t1), full_spec(t2), full_spec(t3), full_spec(t4), full_spec(t5),
        ],
        out_specs=pl.BlockSpec((B, Dout), lambda n: (n, 0)),
        compiler_params=pltpu.CompilerParams(
            dimension_semantics=("parallel",),            # batch blocks shard across v7x TCs
            vmem_limit_bytes=32 * 1024 * 1024,            # far under v7x's 64 MiB physical
        ),
    )(x_flat, t1, t2, t3, t4, t5)

    return out_flat.reshape(N, Cout, Lf)


# ------------------------- numpy reference (checking) -------------------------
def _ref_decoder(x_ncl, p):
    def leaky(v):
        return np.where(v > 0, v, 0.2 * v)

    def conv1d(x, w, pad):                    # x: (N,Cin,L), w: (Cout,Cin,K)
        N, Cin, L = x.shape
        Cout, _, K = w.shape
        xp = np.pad(x, ((0, 0), (0, 0), (pad, pad)))
        Lout = L + 2 * pad - K + 1
        out = np.zeros((N, Cout, Lout), np.float32)
        for k in range(K):
            out += np.einsum("ncl,oc->nol", xp[:, :, k:k + Lout], w[:, :, k])
        return out

    def convT1d(x, w):                        # x: (N,Cin,L), w: (Cin,Cout,K)
        N, Cin, L = x.shape
        _, Cout, K = w.shape
        out = np.zeros((N, Cout, L + K - 1), np.float32)
        for k in range(K):
            out[:, :, k:k + L] += np.einsum("ncl,co->nol", x, w[:, :, k])
        return out

    def up(x):
        return np.repeat(x, 2, axis=2)

    x = np.asarray(x_ncl, np.float32)
    x = leaky(convT1d(x, np.asarray(p["w1_t"])))
    x = up(x)
    x = leaky(conv1d(x, np.asarray(p["w2_t"]), 1))
    x = up(x)
    x = leaky(conv1d(x, np.asarray(p["w3_t"]), 1))
    x = up(x)
    x = leaky(conv1d(x, np.asarray(p["w4_t"]), 1))
    x = up(x)
    x = np.tanh(conv1d(x, np.asarray(p["w5_t"]), 1))
    return x


if __name__ == "__main__":
    ngf, embed_dim = 8, 16
    N, L = 16, 4          # N=16 -> two parallel batch blocks of 8 (sublane-aligned)

    key = jax.random.PRNGKey(0)
    ks = jax.random.split(key, 6)
    # PyTorch-native weight shapes, deterministic init (synthetic, not a checkpoint).
    params = {
        "w1_t": 0.1 * jax.random.normal(ks[0], (embed_dim, ngf * 2, 2), jnp.float32),  # ConvT1d
        "w2_t": 0.1 * jax.random.normal(ks[1], (ngf * 2, ngf * 2, 3), jnp.float32),
        "w3_t": 0.1 * jax.random.normal(ks[2], (ngf, ngf * 2, 3), jnp.float32),
        "w4_t": 0.1 * jax.random.normal(ks[3], (ngf, ngf, 3), jnp.float32),
        "w5_t": 0.1 * jax.random.normal(ks[4], (2, ngf, 3), jnp.float32),
    }
    x = jax.random.normal(ks[5], (N, embed_dim, L), jnp.float32)   # PyTorch NCL input

    packed = pack_decoder_params(params, L)        # hoisted weight folding, outside jit
    fwd = jax.jit(decoder_forward)
    out = jax.block_until_ready(fwd(x, packed))

    ref = _ref_decoder(x, params)
    assert out.shape == ref.shape == (N, 2, 16 * (L + 1)), (out.shape, ref.shape)
    np.testing.assert_allclose(np.asarray(out), ref, rtol=1e-3, atol=1e-3)
    print("KERNEL_OK")
</pallas_src>

<mosaic_0001>
module attributes {stable_mosaic.version = 11 : i64} {
  func.func @_decoder_kernel(%arg0: i32, %arg1: memref<8x64xf32, #tpu.memory_space<vmem>>, %arg2: memref<64x80xf32, #tpu.memory_space<vmem>>, %arg3: memref<80x160xf32, #tpu.memory_space<vmem>>, %arg4: memref<160x160xf32, #tpu.memory_space<vmem>>, %arg5: memref<160x320xf32, #tpu.memory_space<vmem>>, %arg6: memref<320x160xf32, #tpu.memory_space<vmem>>, %arg7: memref<8x160xf32, #tpu.memory_space<vmem>>) attributes {dimension_semantics = [#tpu.dimension_semantics<parallel>], iteration_bounds = array<i64: 2>, scalar_prefetch = 0 : i64, scratch_operands = 0 : i64, tpu.core_type = #tpu.core_type<tc>, window_params = [{transform_indices = @transform_0, window_bounds = array<i64: 8, 64>}, {pipeline_mode = #tpu.pipeline_mode<synchronous>, transform_indices = @transform_1, window_bounds = array<i64: 64, 80>}, {pipeline_mode = #tpu.pipeline_mode<synchronous>, transform_indices = @transform_2, window_bounds = array<i64: 80, 160>}, {pipeline_mode = #tpu.pipeline_mode<synchronous>, transform_indices = @transform_3, window_bounds = array<i64: 160, 160>}, {pipeline_mode = #tpu.pipeline_mode<synchronous>, transform_indices = @transform_4, window_bounds = array<i64: 160, 320>}, {pipeline_mode = #tpu.pipeline_mode<synchronous>, transform_indices = @transform_5, window_bounds = array<i64: 320, 160>}, {transform_indices = @transform_6, window_bounds = array<i64: 8, 160>}]} {
    %c0 = arith.constant 0 : index
    %c0_0 = arith.constant 0 : index
    %0 = vector.load %arg1[%c0, %c0_0] : memref<8x64xf32, #tpu.memory_space<vmem>>, vector<8x64xf32>
    %c0_1 = arith.constant 0 : index
    %c0_2 = arith.constant 0 : index
    %1 = vector.load %arg2[%c0_1, %c0_2] : memref<64x80xf32, #tpu.memory_space<vmem>>, vector<64x80xf32>
    %cst = arith.constant dense<0.000000e+00> : vector<8x80xf32>
    %2 = tpu.matmul %0, %1, %cst {dimension_numbers = #tpu.dot_dimension_numbers<[1], [0], [0], [1], [0, 0, 1, 1], [], []>} : vector<8x64xf32>, vector<64x80xf32>, vector<8x80xf32> -> vector<8x80xf32>
    %cst_3 = arith.constant 0.000000e+00 : f32
    %3 = vector.broadcast %cst_3 : f32 to vector<8x80xf32>
    %4 = arith.cmpf ogt, %2, %3 : vector<8x80xf32>
    %cst_4 = arith.constant 2.000000e-01 : f32
    %5 = vector.broadcast %cst_4 : f32 to vector<8x80xf32>
    %6 = arith.mulf %5, %2 : vector<8x80xf32>
    %7 = arith.select %4, %2, %6 : vector<8x80xi1>, vector<8x80xf32>
    %c0_5 = arith.constant 0 : index
    %c0_6 = arith.constant 0 : index
    %8 = vector.load %arg3[%c0_5, %c0_6] : memref<80x160xf32, #tpu.memory_space<vmem>>, vector<80x160xf32>
    %cst_7 = arith.constant dense<0.000000e+00> : vector<8x160xf32>
    %9 = tpu.matmul %7, %8, %cst_7 {dimension_numbers = #tpu.dot_dimension_numbers<[1], [0], [0], [1], [0, 0, 1, 1], [], []>} : vector<8x80xf32>, vector<80x160xf32>, vector<8x160xf32> -> vector<8x160xf32>
    %cst_8 = arith.constant 0.000000e+00 : f32
    %10 = vector.broadcast %cst_8 : f32 to vector<8x160xf32>
    %11 = arith.cmpf ogt, %9, %10 : vector<8x160xf32>
    %cst_9 = arith.constant 2.000000e-01 : f32
    %12 = vector.broadcast %cst_9 : f32 to vector<8x160xf32>
    %13 = arith.mulf %12, %9 : vector<8x160xf32>
    %14 = arith.select %11, %9, %13 : vector<8x160xi1>, vector<8x160xf32>
    %c0_10 = arith.constant 0 : index
    %c0_11 = arith.constant 0 : index
    %15 = vector.load %arg4[%c0_10, %c0_11] : memref<160x160xf32, #tpu.memory_space<vmem>>, vector<160x160xf32>
    %cst_12 = arith.constant dense<0.000000e+00> : vector<8x160xf32>
    %16 = tpu.matmul %14, %15, %cst_12 {dimension_numbers = #tpu.dot_dimension_numbers<[1], [0], [0], [1], [0, 0, 1, 1], [], []>} : vector<8x160xf32>, vector<160x160xf32>, vector<8x160xf32> -> vector<8x160xf32>
    %cst_13 = arith.constant 0.000000e+00 : f32
    %17 = vector.broadcast %cst_13 : f32 to vector<8x160xf32>
    %18 = arith.cmpf ogt, %16, %17 : vector<8x160xf32>
    %cst_14 = arith.constant 2.000000e-01 : f32
    %19 = vector.broadcast %cst_14 : f32 to vector<8x160xf32>
    %20 = arith.mulf %19, %16 : vector<8x160xf32>
    %21 = arith.select %18, %16, %20 : vector<8x160xi1>, vector<8x160xf32>
    %c0_15 = arith.constant 0 : index
    %c0_16 = arith.constant 0 : index
    %22 = vector.load %arg5[%c0_15, %c0_16] : memref<160x320xf32, #tpu.memory_space<vmem>>, vector<160x320xf32>
    %cst_17 = arith.constant dense<0.000000e+00> : vector<8x320xf32>
    %23 = tpu.matmul %21, %22, %cst_17 {dimension_numbers = #tpu.dot_dimension_numbers<[1], [0], [0], [1], [0, 0, 1, 1], [], []>} : vector<8x160xf32>, vector<160x320xf32>, vector<8x320xf32> -> vector<8x320xf32>
    %cst_18 = arith.constant 0.000000e+00 : f32
    %24 = vector.broadcast %cst_18 : f32 to vector<8x320xf32>
    %25 = arith.cmpf ogt, %23, %24 : vector<8x320xf32>
    %cst_19 = arith.constant 2.000000e-01 : f32
    %26 = vector.broadcast %cst_19 : f32 to vector<8x320xf32>
    %27 = arith.mulf %26, %23 : vector<8x320xf32>
    %28 = arith.select %25, %23, %27 : vector<8x320xi1>, vector<8x320xf32>
    %c0_20 = arith.constant 0 : index
    %c0_21 = arith.constant 0 : index
    %29 = vector.load %arg6[%c0_20, %c0_21] : memref<320x160xf32, #tpu.memory_space<vmem>>, vector<320x160xf32>
    %cst_22 = arith.constant dense<0.000000e+00> : vector<8x160xf32>
    %30 = tpu.matmul %28, %29, %cst_22 {dimension_numbers = #tpu.dot_dimension_numbers<[1], [0], [0], [1], [0, 0, 1, 1], [], []>} : vector<8x320xf32>, vector<320x160xf32>, vector<8x160xf32> -> vector<8x160xf32>
    %31 = math.tanh %30 : vector<8x160xf32>
    %c0_23 = arith.constant 0 : index
    %c0_24 = arith.constant 0 : index
    %32 = vector.load %arg7[%c0_23, %c0_24] : memref<8x160xf32, #tpu.memory_space<vmem>>, vector<8x160xf32>
    tpu.vector_store %arg7[%c0_23, %c0_24], %31 {strides = array<i32>} : memref<8x160xf32, #tpu.memory_space<vmem>>, vector<8x160xf32>,
    return
  }
  func.func @transform_0(%arg0: i32) -> (i32, i32) {
    %c0_i32 = arith.constant 0 : i32
    %c0_i32_0 = arith.constant 0 : i32
    return %arg0, %c0_i32 : i32, i32
  }
  func.func @transform_1(%arg0: i32) -> (i32, i32) {
    %c0_i32 = arith.constant 0 : i32
    %c0_i32_0 = arith.constant 0 : i32
    %c0_i32_1 = arith.constant 0 : i32
    return %c0_i32, %c0_i32_0 : i32, i32
  }
  func.func @transform_2(%arg0: i32) -> (i32, i32) {
    %c0_i32 = arith.constant 0 : i32
    %c0_i32_0 = arith.constant 0 : i32
    %c0_i32_1 = arith.constant 0 : i32
    return %c0_i32, %c0_i32_0 : i32, i32
  }
  func.func @transform_3(%arg0: i32) -> (i32, i32) {
    %c0_i32 = arith.constant 0 : i32
    %c0_i32_0 = arith.constant 0 : i32
    %c0_i32_1 = arith.constant 0 : i32
    return %c0_i32, %c0_i32_0 : i32, i32
  }
  func.func @transform_4(%arg0: i32) -> (i32, i32) {
    %c0_i32 = arith.constant 0 : i32
    %c0_i32_0 = arith.constant 0 : i32
    %c0_i32_1 = arith.constant 0 : i32
    return %c0_i32, %c0_i32_0 : i32, i32
  }
  func.func @transform_5(%arg0: i32) -> (i32, i32) {
    %c0_i32 = arith.constant 0 : i32
    %c0_i32_0 = arith.constant 0 : i32
    %c0_i32_1 = arith.constant 0 : i32
    return %c0_i32, %c0_i32_0 : i32, i32
  }
  func.func @transform_6(%arg0: i32) -> (i32, i32) {
    %c0_i32 = arith.constant 0 : i32
    %c0_i32_0 = arith.constant 0 : i32
    return %arg0, %c0_i32 : i32, i32
  }
}

</mosaic_0001>

<llo_original>
// kernel: decoder_forward.1
$region0: #{decoder_forward.1}
  #allocation0 [shape = 'u32[]', space=smem, size = 0x4, offset = 0x4, fixed_abs, tag = 'smem constant byte address 0x4 - core index']
  #allocation1 [shape = 'u32[72,128]{1,0:T(1,128)}', space=vmem, size = 0x9000, scoped, tag = 'internal scratch']
  %s0 = inlined_call_operand.vmem [shape: f32[16,64], index: 0, kind: input, shape index: {}]
  %s1 = inlined_call_operand.vmem [shape: f32[64,80], index: 1, kind: input, shape index: {}]
  %s2 = inlined_call_operand.vmem [shape: f32[80,160], index: 2, kind: input, shape index: {}]
  %s3 = inlined_call_operand.vmem [shape: f32[160,160], index: 3, kind: input, shape index: {}]
  %s4 = inlined_call_operand.vmem [shape: f32[160,320], index: 4, kind: input, shape index: {}]
  %s5 = inlined_call_operand.vmem [shape: f32[320,160], index: 5, kind: input, shape index: {}]
  %s6 = inlined_call_operand.vmem [shape: f32[16,160], index: 6, kind: output, shape index: {}]
  %s7 = sld [smem:[#allocation0]]
  $region57: #{decoder_forward.1} parent=0
    _
  %s9 = ssub.s32 1, %s7
  %s10 = scalar_select 0, %s9, %s7
  loop: start=0, step=1, limit=4
  $region2: #{decoder_forward.1} parent=0 // loop_pre_header
    _
  $region3: #{decoder_forward.1} parent=0 // loop_header
    %s12 = sphi 0, %s16
    %p13 = scmp.ge.s32.totalorder %s12, 4
    %s22 = sphi 0, %s24
    %s25 = sphi 0, %s22
    %s26 = sphi 0, %s25
    %s42 = sphi 0, %s26
    %s46 = sphi 0, %s46
    %s48 = sphi 0, %s46
    %s49 = sphi 0, %s48
    %s63 = sphi 0, %s49
    %s67 = sphi 0, %s67
    %s69 = sphi 0, %s67
    %s70 = sphi 0, %s69
    %s84 = sphi 0, %s70
    %s88 = sphi 0, %s88
    %s90 = sphi 0, %s88
    %s91 = sphi 0, %s90
    %s105 = sphi 0, %s91
    %s109 = sphi 0, %s109
    %s111 = sphi 0, %s109
    %s112 = sphi 0, %s111
    %s126 = sphi 0, %s112
    %s130 = sphi 0, %s130
    %s132 = sphi 0, %s130
    %s133 = sphi 0, %s132
    %s147 = sphi 0, %s133
    %s153 = sphi 0, %s155
    %s156 = sphi 0, %s153
    %s157 = sphi 0, %s156
    %s173 = sphi 0, %s157
  $region4: #{decoder_forward.1} parent=0 // loop_header_branch
    %15 = sbr.rel (%p13) target = $region8
  $region5: #{decoder_forward.1} parent=0 // loop_body
    %s17 = ssub.s32 %s12, 1
    %s18 = ssub.s32 %s12, 2
    %s19 = sadd.s32 %s12, 1
    %s20 = ssub.s32 %s12, %s19
    %p21 = scmp.eq.s32.totalorder %s20, 0
    %s23 = sadd.s32 %s22, 1
    %s24 = scalar_select %p21, %s22, %s23
    %p27 = pneg %p21
    %p28 = scmp.eq.s32.totalorder %s12, 1
    %p29 = por %p27, %p28
    %p30 = scmp.ne.s32.totalorder %s22, %s25
    %p31 = scmp.eq.s32.totalorder %s12, 0
    %p32 = por %p30, %p31
    %p33 = scmp.ne.s32.totalorder %s22, %s25
    %p34 = scmp.eq.s32.totalorder %s17, 1
    %p35 = por %p33, %p34
    %p36 = scmp.ne.s32.totalorder %s25, %s26
    %p37 = scmp.eq.s32.totalorder %s17, 0
    %p38 = por %p36, %p37
    %p39 = scmp.ne.s32.totalorder %s25, %s26
    %p40 = scmp.eq.s32.totalorder %s18, 1
    %p41 = por %p39, %p40
    %p43 = scmp.ne.s32.totalorder %s26, %s42
    %p44 = scmp.eq.s32.totalorder %s18, 0
    %p45 = por %p43, %p44
    %s47 = sadd.s32 %s46, 1
    %p50 = scmp.eq.s32.totalorder %s12, 1
    %p51 = scmp.ne.s32.totalorder %s46, %s48
    %p52 = scmp.eq.s32.totalorder %s12, 0
    %p53 = por %p51, %p52
    %p54 = scmp.ne.s32.totalorder %s46, %s48
    %p55 = scmp.eq.s32.totalorder %s17, 1
    %p56 = por %p54, %p55
    %p57 = scmp.ne.s32.totalorder %s48, %s49
    %p58 = scmp.eq.s32.totalorder %s17, 0
    %p59 = por %p57, %p58
    %p60 = scmp.ne.s32.totalorder %s48, %s49
    %p61 = scmp.eq.s32.totalorder %s18, 1
    %p62 = por %p60, %p61
    %p64 = scmp.ne.s32.totalorder %s49, %s63
    %p65 = scmp.eq.s32.totalorder %s18, 0
    %p66 = por %p64, %p65
    %s68 = sadd.s32 %s67, 1
    %p71 = scmp.eq.s32.totalorder %s12, 1
    %p72 = scmp.ne.s32.totalorder %s67, %s69
    %p73 = scmp.eq.s32.totalorder %s12, 0
    %p74 = por %p72, %p73
    %p75 = scmp.ne.s32.totalorder %s67, %s69
    %p76 = scmp.eq.s32.totalorder %s17, 1
    %p77 = por %p75, %p76
    %p78 = scmp.ne.s32.totalorder %s69, %s70
    %p79 = scmp.eq.s32.totalorder %s17, 0
    %p80 = por %p78, %p79
    %p81 = scmp.ne.s32.totalorder %s69, %s70
    %p82 = scmp.eq.s32.totalorder %s18, 1
    %p83 = por %p81, %p82
    %p85 = scmp.ne.s32.totalorder %s70, %s84
    %p86 = scmp.eq.s32.totalorder %s18, 0
    %p87 = por %p85, %p86
    %s89 = sadd.s32 %s88, 1
    %p92 = scmp.eq.s32.totalorder %s12, 1
    %p93 = scmp.ne.s32.totalorder %s88, %s90
    %p94 = scmp.eq.s32.totalorder %s12, 0
    %p95 = por %p93, %p94
    %p96 = scmp.ne.s32.totalorder %s88, %s90
    %p97 = scmp.eq.s32.totalorder %s17, 1
    %p98 = por %p96, %p97
    %p99 = scmp.ne.s32.totalorder %s90, %s91
    %p100 = scmp.eq.s32.totalorder %s17, 0
    %p101 = por %p99, %p100
    %p102 = scmp.ne.s32.totalorder %s90, %s91
    %p103 = scmp.eq.s32.totalorder %s18, 1
    %p104 = por %p102, %p103
    %p106 = scmp.ne.s32.totalorder %s91, %s105
    %p107 = scmp.eq.s32.totalorder %s18, 0
    %p108 = por %p106, %p107
    %s110 = sadd.s32 %s109, 1
    %p113 = scmp.eq.s32.totalorder %s12, 1
    %p114 = scmp.ne.s32.totalorder %s109, %s111
    %p115 = scmp.eq.s32.totalorder %s12, 0
    %p116 = por %p114, %p115
    %p117 = scmp.ne.s32.totalorder %s109, %s111
    %p118 = scmp.eq.s32.totalorder %s17, 1
    %p119 = por %p117, %p118
    %p120 = scmp.ne.s32.totalorder %s111, %s112
    %p121 = scmp.eq.s32.totalorder %s17, 0
    %p122 = por %p120, %p121
    %p123 = scmp.ne.s32.totalorder %s111, %s112
    %p124 = scmp.eq.s32.totalorder %s18, 1
    %p125 = por %p123, %p124
    %p127 = scmp.ne.s32.totalorder %s112, %s126
    %p128 = scmp.eq.s32.totalorder %s18, 0
    %p129 = por %p127, %p128
    %s131 = sadd.s32 %s130, 1
    %p134 = scmp.eq.s32.totalorder %s12, 1
    %p135 = scmp.ne.s32.totalorder %s130, %s132
    %p136 = scmp.eq.s32.totalorder %s12, 0
    %p137 = por %p135, %p136
    %p138 = scmp.ne.s32.totalorder %s130, %s132
    %p139 = scmp.eq.s32.totalorder %s17, 1
    %p140 = por %p138, %p139
    %p141 = scmp.ne.s32.totalorder %s132, %s133
    %p142 = scmp.eq.s32.totalorder %s17, 0
    %p143 = por %p141, %p142
    %p144 = scmp.ne.s32.totalorder %s132, %s133
    %p145 = scmp.eq.s32.totalorder %s18, 1
    %p146 = por %p144, %p145
    %p148 = scmp.ne.s32.totalorder %s133, %s147
    %p149 = scmp.eq.s32.totalorder %s18, 0
    %p150 = por %p148, %p149
    %s151 = ssub.s32 %s12, %s19
    %p152 = scmp.eq.s32.totalorder %s151, 0
    %s154 = sadd.s32 %s153, 1
    %s155 = scalar_select %p152, %s153, %s154
    %p158 = pneg %p152
    %p159 = scmp.eq.s32.totalorder %s12, 1
    %p160 = por %p158, %p159
    %p161 = scmp.ne.s32.totalorder %s153, %s156
    %p162 = scmp.eq.s32.totalorder %s12, 0
    %p163 = por %p161, %p162
    %p164 = scmp.ne.s32.totalorder %s153, %s156
    %p165 = scmp.eq.s32.totalorder %s17, 1
    %p166 = por %p164, %p165
    %p167 = scmp.ne.s32.totalorder %s156, %s157
    %p168 = scmp.eq.s32.totalorder %s17, 0
    %p169 = por %p167, %p168
    %p170 = scmp.ne.s32.totalorder %s156, %s157
    %p171 = scmp.eq.s32.totalorder %s18, 1
    %p172 = por %p170, %p171
    %p174 = scmp.ne.s32.totalorder %s157, %s173
    %p175 = scmp.eq.s32.totalorder %s18, 0
    %p176 = por %p174, %p175
    %p177 = scmp.le.s32.totalorder 1, %s12
    %p178 = scmp.lt.s32.totalorder %s12, 3
    %p179 = pnand %p177, %p178
    %p180 = pneg %p179
    // Predicated region
    $region9: #{decoder_forward.1} parent=5 // pred_check
      _
    $region10: #{decoder_forward.1} parent=5 // pred_check_branch
      %182 = sbr.rel (%p179) target = $region12
    $region11: #{decoder_forward.1} parent=5 // pred_region
      %s183 = ssub.s32 %s12, 1
      // Predicated region
      $region13: #{decoder_forward.1} parent=11 // pred_check
        %p184 = pneg %p59
      $region14: #{decoder_forward.1} parent=11 // pred_check_branch
        %186 = sbr.rel (%p184) target = $region16
      $region15: #{decoder_forward.1} parent=11 // pred_region
        _
      $region16: #{decoder_forward.1} parent=11 // pred_fallthru
        _
      // Predicated region
      $region17: #{decoder_forward.1} parent=11 // pred_check
        %p187 = pneg %p80
      $region18: #{decoder_forward.1} parent=11 // pred_check_branch
        %189 = sbr.rel (%p187) target = $region20
      $region19: #{decoder_forward.1} parent=11 // pred_region
        _
      $region20: #{decoder_forward.1} parent=11 // pred_fallthru
        _
      // Predicated region
      $region21: #{decoder_forward.1} parent=11 // pred_check
        %p190 = pneg %p101
      $region22: #{decoder_forward.1} parent=11 // pred_check_branch
        %192 = sbr.rel (%p190) target = $region24
      $region23: #{decoder_forward.1} parent=11 // pred_region
        _
      $region24: #{decoder_forward.1} parent=11 // pred_fallthru
        _
      // Predicated region
      $region25: #{decoder_forward.1} parent=11 // pred_check
        %p193 = pneg %p122
      $region26: #{decoder_forward.1} parent=11 // pred_check_branch
        %195 = sbr.rel (%p193) target = $region28
      $region27: #{decoder_forward.1} parent=11 // pred_region
        _
      $region28: #{decoder_forward.1} parent=11 // pred_fallthru
        _
      // Predicated region
      $region29: #{decoder_forward.1} parent=11 // pred_check
        %p196 = pneg %p143
      $region30: #{decoder_forward.1} parent=11 // pred_check_branch
        %198 = sbr.rel (%p196) target = $region32
      $region31: #{decoder_forward.1} parent=11 // pred_region
        _
      $region32: #{decoder_forward.1} parent=11 // pred_fallthru
        _
    $region12: #{decoder_forward.1} parent=5 // pred_fallthru
      _
    %p199 = scmp.lt.s32.totalorder %s12, 2
    // Predicated region
    $region33: #{decoder_forward.1} parent=5 // pred_check
      %p200 = pneg %p199
    $region34: #{decoder_forward.1} parent=5 // pred_check_branch
      %202 = sbr.rel (%p200) target = $region36
    $region35: #{decoder_forward.1} parent=5 // pred_region
      // Predicated region
      $region37: #{decoder_forward.1} parent=35 // pred_check
        %p203 = pneg %p32
      $region38: #{decoder_forward.1} parent=35 // pred_check_branch
        %205 = sbr.rel (%p203) target = $region40
      $region39: #{decoder_forward.1} parent=35 // pred_region
        %p206 = scmp.lt.s32.totalorder %s12, 1
        %s207 = scalar_select %p206, %s12, 1
        %s208 = smul.addr %s207, 8
        %s209 = scalar_lea.vmem %s0, %s208
      $region40: #{decoder_forward.1} parent=35 // pred_fallthru
        _
    $region36: #{decoder_forward.1} parent=5 // pred_fallthru
      _
    %p210 = scmp.le.s32.totalorder 1, %s12
    %p211 = scmp.lt.s32.totalorder %s12, 3
    %p212 = pnand %p210, %p211
    %p213 = pneg %p212
    // Predicated region
    $region41: #{decoder_forward.1} parent=5 // pred_check
      _
    $region42: #{decoder_forward.1} parent=5 // pred_check_branch
      %215 = sbr.rel (%p212) target = $region44
    $region43: #{decoder_forward.1} parent=5 // pred_region
      %s216 = ssub.s32 %s12, 1
      %p217 = scmp.lt.s32.totalorder %s17, 1
      %s218 = scalar_select %p217, %s17, 1
      %s219 = smul.addr %s218, 8
      %s220 = scalar_lea.vmem %s0, %s219
      %p221 = pneg %p38
      %p222 = pneg %p35
      %p223 = pneg %p59
      %p224 = pneg %p56
      %p225 = pneg %p80
      %p226 = pneg %p77
      %p227 = pneg %p101
      %p228 = pneg %p98
      %p229 = pneg %p122
      %p230 = pneg %p119
      %p231 = pneg %p143
      %p232 = pneg %p140
      %p233 = pneg %p169
      %p234 = pneg %p166
      %p235 = scmp.lt.s32.totalorder %s17, 1
      %s236 = scalar_select %p235, %s17, 1
      %s237 = smul.addr %s236, 2
      %s238 = smul.addr %s237, 8
      %s239 = scalar_lea.vmem %s6, %s238
      %p240 = scmp.lt.s32.totalorder %s17, 1
      %s241 = scalar_select %p240, %s17, 1
      %s242 = smul.addr %s241, 8
      %s243 = scalar_lea.vmem %s0, %s242
      %p244 = scmp.lt.s32.totalorder %s17, 1
      %s245 = scalar_select %p244, %s17, 1
      %s246 = smul.addr %s245, 2
      %s247 = smul.addr %s246, 8
      %s248 = scalar_lea.vmem %s6, %s247
      %v249 = vld [vmem:[%s243] sm:$0xff]
      %v250 = vld [vmem:[%s1] sm:$0xff]
      %v251 = vld [vmem:[%s1 + $0x8] sm:$0xff]
      %v252 = vld [vmem:[%s1 + $0x10] sm:$0xff]
      %v253 = vld [vmem:[%s1 + $0x18] sm:$0xff]
      %v254 = vld [vmem:[%s1 + $0x20] sm:$0xff]
      %v255 = vld [vmem:[%s1 + $0x28] sm:$0xff]
      %v256 = vld [vmem:[%s1 + $0x30] sm:$0xff]
      %v257 = vld [vmem:[%s1 + $0x38] sm:$0xff]
      %vm258 = vcmask 523264
      %v260 = vsel %vm258, %v249, 0
      %262 = vmatpush.msra.mxu0 0.0
      %263 = vmatpush.msra.mxu0 0.0
      %264 = vmatpush.msra.mxu0 0.0
      %265 = vmatpush.msra.mxu0 0.0
      %266 = vmatpush.msra.mxu0 0.0
      %267 = vmatpush.msra.mxu0 0.0
      %268 = vmatpush.msra.mxu0 0.0
      %269 = vmatpush.msra.mxu0 0.0
      %270 = vmatpush.msra.mxu0 %v257
      %271 = vmatpush.msra.mxu0 %v256
      %272 = vmatpush.msra.mxu0 %v255
      %273 = vmatpush.msra.mxu0 %v254
      %274 = vmatpush.msra.mxu0 %v253
      %275 = vmatpush.msra.mxu0 %v252
      %276 = vmatpush.msra.mxu0 %v251
      %277 = vmatpush.msra.mxu0 %v250
      %278 = vmatmul.f32.gmra.mxu0 %v260
      %v279 = vpop.f32.mrf.mxu0
      %v280 = vadd.f32 0.0, %v279
      %281 = vdwg.mxu0
      %vm282 = vcmp.gt.f32.partialorder %v280, 0.0
      %v283 = vmul.f32 %v280, 0.2
      %v284 = vsel %vm282, %v280, %v283
      %v285 = vld [vmem:[%s2] sm:$0xff]
      %v286 = vld [vmem:[%s2 + $0x8] sm:$0xff]
      %v287 = vld [vmem:[%s2 + $0x10] sm:$0xff]
      %v288 = vld [vmem:[%s2 + $0x18] sm:$0xff]
      %v289 = vld [vmem:[%s2 + $0x20] sm:$0xff]
      %v290 = vld [vmem:[%s2 + $0x28] sm:$0xff]
      %v291 = vld [vmem:[%s2 + $0x30] sm:$0xff]
      %v292 = vld [vmem:[%s2 + $0x38] sm:$0xff]
      %v293 = vld [vmem:[%s2 + $0x40] sm:$0xff]
      %v294 = vld [vmem:[%s2 + $0x48] sm:$0xff]
      %v295 = vld [vmem:[%s2 + $0x50] sm:$0xff]
      %v296 = vld [vmem:[%s2 + $0x58] sm:$0xff]
      %v297 = vld [vmem:[%s2 + $0x60] sm:$0xff]
      %v298 = vld [vmem:[%s2 + $0x68] sm:$0xff]
      %v299 = vld [vmem:[%s2 + $0x70] sm:$0xff]
      %v300 = vld [vmem:[%s2 + $0x78] sm:$0xff]
      %v301 = vld [vmem:[%s2 + $0x80] sm:$0xff]
      %v302 = vld [vmem:[%s2 + $0x88] sm:$0xff]
      %v303 = vld [vmem:[%s2 + $0x90] sm:$0xff]
      %v304 = vld [vmem:[%s2 + $0x98] sm:$0xff]
      %vm305 = vcmask 654336
      %v307 = vsel %vm305, %v284, 0
      %309 = vmatpush.msra.mxu0 0.0
      %310 = vmatpush.msra.mxu0 0.0
      %311 = vmatpush.msra.mxu0 0.0
      %312 = vmatpush.msra.mxu0 0.0
      %313 = vmatpush.msra.mxu0 0.0
      %314 = vmatpush.msra.mxu0 0.0
      %315 = vmatpush.msra.mxu0 %v303
      %316 = vmatpush.msra.mxu0 %v301
      %317 = vmatpush.msra.mxu0 %v299
      %318 = vmatpush.msra.mxu0 %v297
      %319 = vmatpush.msra.mxu0 %v295
      %320 = vmatpush.msra.mxu0 %v293
      %321 = vmatpush.msra.mxu0 %v291
      %322 = vmatpush.msra.mxu0 %v289
      %323 = vmatpush.msra.mxu0 %v287
      %324 = vmatpush.msra.mxu0 %v285
      %325 = vmatmul.f32.gmra.mxu0 %v307
      %v326 = vpop.f32.mrf.mxu0
      %v327 = vadd.f32 0.0, %v326
      %328 = vdwg.mxu0
      %329 = vmatpush.msra.mxu0 0.0
      %330 = vmatpush.msra.mxu0 0.0
      %331 = vmatpush.msra.mxu0 0.0
      %332 = vmatpush.msra.mxu0 0.0
      %333 = vmatpush.msra.mxu0 0.0
      %334 = vmatpush.msra.mxu0 0.0
      %335 = vmatpush.msra.mxu0 %v304
      %336 = vmatpush.msra.mxu0 %v302
      %337 = vmatpush.msra.mxu0 %v300
      %338 = vmatpush.msra.mxu0 %v298
      %339 = vmatpush.msra.mxu0 %v296
      %340 = vmatpush.msra.mxu0 %v294
      %341 = vmatpush.msra.mxu0 %v292
      %342 = vmatpush.msra.mxu0 %v290
      %343 = vmatpush.msra.mxu0 %v288
      %344 = vmatpush.msra.mxu0 %v286
      %345 = vmatmul.f32.gmra.mxu0 %v307
      %v346 = vpop.f32.mrf.mxu0
      %v347 = vadd.f32 0.0, %v346
      %348 = vdwg.mxu0
      %vm349 = vcmp.gt.f32.partialorder %v327, 0.0
      %vm350 = vcmp.gt.f32.partialorder %v347, 0.0
      %v351 = vmul.f32 %v327, 0.2
      %v352 = vmul.f32 %v347, 0.2
      %v353 = vsel %vm349, %v327, %v351
      %v354 = vsel %vm350, %v347, %v352
      %v355 = vld [vmem:[%s3] sm:$0xff]
      %v356 = vld [vmem:[%s3 + $0x8] sm:$0xff]
      %v357 = vld [vmem:[%s3 + $0x10] sm:$0xff]
      %v358 = vld [vmem:[%s3 + $0x18] sm:$0xff]
      %v359 = vld [vmem:[%s3 + $0x20] sm:$0xff]
      %v360 = vld [vmem:[%s3 + $0x28] sm:$0xff]
      %v361 = vld [vmem:[%s3 + $0x30] sm:$0xff]
      %v362 = vld [vmem:[%s3 + $0x38] sm:$0xff]
      %v363 = vld [vmem:[%s3 + $0x40] sm:$0xff]
      %v364 = vld [vmem:[%s3 + $0x48] sm:$0xff]
      %v365 = vld [vmem:[%s3 + $0x50] sm:$0xff]
      %v366 = vld [vmem:[%s3 + $0x58] sm:$0xff]
      %v367 = vld [vmem:[%s3 + $0x60] sm:$0xff]
      %v368 = vld [vmem:[%s3 + $0x68] sm:$0xff]
      %v369 = vld [vmem:[%s3 + $0x70] sm:$0xff]
      %v370 = vld [vmem:[%s3 + $0x78] sm:$0xff]
      %v371 = vld [vmem:[%s3 + $0x80] sm:$0xff]
      %v372 = vld [vmem:[%s3 + $0x88] sm:$0xff]
      %v373 = vld [vmem:[%s3 + $0x90] sm:$0xff]
      %v374 = vld [vmem:[%s3 + $0x98] sm:$0xff]
      %v375 = vld [vmem:[%s3 + $0xa0] sm:$0xff]
      %v376 = vld [vmem:[%s3 + $0xa8] sm:$0xff]
      %v377 = vld [vmem:[%s3 + $0xb0] sm:$0xff]
      %v378 = vld [vmem:[%s3 + $0xb8] sm:$0xff]
      %v379 = vld [vmem:[%s3 + $0xc0] sm:$0xff]
      %v380 = vld [vmem:[%s3 + $0xc8] sm:$0xff]
      %v381 = vld [vmem:[%s3 + $0xd0] sm:$0xff]
      %v382 = vld [vmem:[%s3 + $0xd8] sm:$0xff]
      %v383 = vld [vmem:[%s3 + $0xe0] sm:$0xff]
      %v384 = vld [vmem:[%s3 + $0xe8] sm:$0xff]
      %v385 = vld [vmem:[%s3 + $0xf0] sm:$0xff]
      %v386 = vld [vmem:[%s3 + $0xf8] sm:$0xff]
      %v387 = vld [vmem:[%s3 + $0x100] sm:$0xff]
      %v388 = vld [vmem:[%s3 + $0x108] sm:$0xff]
      %v389 = vld [vmem:[%s3 + $0x110] sm:$0xff]
      %v390 = vld [vmem:[%s3 + $0x118] sm:$0xff]
      %v391 = vld [vmem:[%s3 + $0x120] sm:$0xff]
      %v392 = vld [vmem:[%s3 + $0x128] sm:$0xff]
      %v393 = vld [vmem:[%s3 + $0x130] sm:$0xff]
      %v394 = vld [vmem:[%s3 + $0x138] sm:$0xff]
      %vm395 = vcmask 261120
      %v397 = vsel %vm395, %v354, 0
      %399 = vmatpush.msra.mxu0 %v385
      %400 = vmatpush.msra.mxu0 %v383
      %401 = vmatpush.msra.mxu0 %v381
      %402 = vmatpush.msra.mxu0 %v379
      %403 = vmatpush.msra.mxu0 %v377
      %404 = vmatpush.msra.mxu0 %v375
      %405 = vmatpush.msra.mxu0 %v373
      %406 = vmatpush.msra.mxu0 %v371
      %407 = vmatpush.msra.mxu0 %v369
      %408 = vmatpush.msra.mxu0 %v367
      %409 = vmatpush.msra.mxu0 %v365
      %410 = vmatpush.msra.mxu0 %v363
      %411 = vmatpush.msra.mxu0 %v361
      %412 = vmatpush.msra.mxu0 %v359
      %413 = vmatpush.msra.mxu0 %v357
      %414 = vmatpush.msra.mxu0 %v355
      %415 = vmatmul.f32.gmra.mxu0 %v353
      %v416 = vpop.f32.mrf.mxu0
      %v417 = vadd.f32 0.0, %v416
      %418 = vdwg.mxu0
      %419 = vmatpush.msra.mxu0 0.0
      %420 = vmatpush.msra.mxu0 0.0
      %421 = vmatpush.msra.mxu0 0.0
      %422 = vmatpush.msra.mxu0 0.0
      %423 = vmatpush.msra.mxu0 0.0
      %424 = vmatpush.msra.mxu0 0.0
      %425 = vmatpush.msra.mxu0 0.0
      %426 = vmatpush.msra.mxu0 0.0
      %427 = vmatpush.msra.mxu0 0.0
      %428 = vmatpush.msra.mxu0 0.0
      %429 = vmatpush.msra.mxu0 0.0
      %430 = vmatpush.msra.mxu0 0.0
      %431 = vmatpush.msra.mxu0 %v393
      %432 = vmatpush.msra.mxu0 %v391
      %433 = vmatpush.msra.mxu0 %v389
      %434 = vmatpush.msra.mxu0 %v387
      %435 = vmatmul.f32.gmra.mxu0 %v397
      %v436 = vpop.f32.mrf.mxu0
      %v437 = vadd.f32 %v417, %v436
      %438 = vdwg.mxu0
      %439 = vmatpush.msra.mxu0 %v386
      %440 = vmatpush.msra.mxu0 %v384
      %441 = vmatpush.msra.mxu0 %v382
      %442 = vmatpush.msra.mxu0 %v380
      %443 = vmatpush.msra.mxu0 %v378
      %444 = vmatpush.msra.mxu0 %v376
      %445 = vmatpush.msra.mxu0 %v374
      %446 = vmatpush.msra.mxu0 %v372
      %447 = vmatpush.msra.mxu0 %v370
      %448 = vmatpush.msra.mxu0 %v368
      %449 = vmatpush.msra.mxu0 %v366
      %450 = vmatpush.msra.mxu0 %v364
      %451 = vmatpush.msra.mxu0 %v362
      %452 = vmatpush.msra.mxu0 %v360
      %453 = vmatpush.msra.mxu0 %v358
      %454 = vmatpush.msra.mxu0 %v356
      %455 = vmatmul.f32.gmra.mxu0 %v353
      %v456 = vpop.f32.mrf.mxu0
      %v457 = vadd.f32 0.0, %v456
      %458 = vdwg.mxu0
      %459 = vmatpush.msra.mxu0 0.0
      %460 = vmatpush.msra.mxu0 0.0
      %461 = vmatpush.msra.mxu0 0.0
      %462 = vmatpush.msra.mxu0 0.0
      %463 = vmatpush.msra.mxu0 0.0
      %464 = vmatpush.msra.mxu0 0.0
      %465 = vmatpush.msra.mxu0 0.0
      %466 = vmatpush.msra.mxu0 0.0
      %467 = vmatpush.msra.mxu0 0.0
      %468 = vmatpush.msra.mxu0 0.0
      %469 = vmatpush.msra.mxu0 0.0
      %470 = vmatpush.msra.mxu0 0.0
      %471 = vmatpush.msra.mxu0 %v394
      %472 = vmatpush.msra.mxu0 %v392
      %473 = vmatpush.msra.mxu0 %v390
      %474 = vmatpush.msra.mxu0 %v388
      %475 = vmatmul.f32.gmra.mxu0 %v397
      %v476 = vpop.f32.mrf.mxu0
      %v477 = vadd.f32 %v457, %v476
      %478 = vdwg.mxu0
      %vm479 = vcmp.gt.f32.partialorder %v437, 0.0
      %vm480 = vcmp.gt.f32.partialorder %v477, 0.0
      %v481 = vmul.f32 %v437, 0.2
      %v482 = vmul.f32 %v477, 0.2
      %v483 = vsel %vm479, %v437, %v481
      %v484 = vsel %vm480, %v477, %v482
      %v485 = vld [vmem:[%s4] sm:$0xff]
      %v486 = vld [vmem:[%s4 + $0x8] sm:$0xff]
      %v487 = vld [vmem:[%s4 + $0x10] sm:$0xff]
      %v488 = vld [vmem:[%s4 + $0x18] sm:$0xff]
      %v489 = vld [vmem:[%s4 + $0x20] sm:$0xff]
      %v490 = vld [vmem:[%s4 + $0x28] sm:$0xff]
      %v491 = vld [vmem:[%s4 + $0x30] sm:$0xff]
      %v492 = vld [vmem:[%s4 + $0x38] sm:$0xff]
      %v493 = vld [vmem:[%s4 + $0x40] sm:$0xff]
      %v494 = vld [vmem:[%s4 + $0x48] sm:$0xff]
      %v495 = vld [vmem:[%s4 + $0x50] sm:$0xff]
      %v496 = vld [vmem:[%s4 + $0x58] sm:$0xff]
      %v497 = vld [vmem:[%s4 + $0x60] sm:$0xff]
      %v498 = vld [vmem:[%s4 + $0x68] sm:$0xff]
      %v499 = vld [vmem:[%s4 + $0x70] sm:$0xff]
      %v500 = vld [vmem:[%s4 + $0x78] sm:$0xff]
      %v501 = vld [vmem:[%s4 + $0x80] sm:$0xff]
      %v502 = vld [vmem:[%s4 + $0x88] sm:$0xff]
      %v503 = vld [vmem:[%s4 + $0x90] sm:$0xff]
      %v504 = vld [vmem:[%s4 + $0x98] sm:$0xff]
      %v505 = vld [vmem:[%s4 + $0xa0] sm:$0xff]
      %v506 = vld [vmem:[%s4 + $0xa8] sm:$0xff]
      %v507 = vld [vmem:[%s4 + $0xb0] sm:$0xff]
      %v508 = vld [vmem:[%s4 + $0xb8] sm:$0xff]
      %v509 = vld [vmem:[%s4 + $0xc0] sm:$0xff]
      %v510 = vld [vmem:[%s4 + $0xc8] sm:$0xff]
      %v511 = vld [vmem:[%s4 + $0xd0] sm:$0xff]
      %v512 = vld [vmem:[%s4 + $0xd8] sm:$0xff]
      %v513 = vld [vmem:[%s4 + $0xe0] sm:$0xff]
      %v514 = vld [vmem:[%s4 + $0xe8] sm:$0xff]
      %v515 = vld [vmem:[%s4 + $0xf0] sm:$0xff]
      %v516 = vld [vmem:[%s4 + $0xf8] sm:$0xff]
      %v517 = vld [vmem:[%s4 + $0x100] sm:$0xff]
      %v518 = vld [vmem:[%s4 + $0x108] sm:$0xff]
      %v519 = vld [vmem:[%s4 + $0x110] sm:$0xff]
      %v520 = vld [vmem:[%s4 + $0x118] sm:$0xff]
      %v521 = vld [vmem:[%s4 + $0x120] sm:$0xff]
      %v522 = vld [vmem:[%s4 + $0x128] sm:$0xff]
      %v523 = vld [vmem:[%s4 + $0x130] sm:$0xff]
      %v524 = vld [vmem:[%s4 + $0x138] sm:$0xff]
      %v525 = vld [vmem:[%s4 + $0x140] sm:$0xff]
      %v526 = vld [vmem:[%s4 + $0x148] sm:$0xff]
      %v527 = vld [vmem:[%s4 + $0x150] sm:$0xff]
      %v528 = vld [vmem:[%s4 + $0x158] sm:$0xff]
      %v529 = vld [vmem:[%s4 + $0x160] sm:$0xff]
      %v530 = vld [vmem:[%s4 + $0x168] sm:$0xff]
      %v531 = vld [vmem:[%s4 + $0x170] sm:$0xff]
      %v532 = vld [vmem:[%s4 + $0x178] sm:$0xff]
      %v533 = vld [vmem:[%s4 + $0x180] sm:$0xff]
      %v534 = vld [vmem:[%s4 + $0x188] sm:$0xff]
      %v535 = vld [vmem:[%s4 + $0x190] sm:$0xff]
      %v536 = vld [vmem:[%s4 + $0x198] sm:$0xff]
      %v537 = vld [vmem:[%s4 + $0x1a0] sm:$0xff]
      %v538 = vld [vmem:[%s4 + $0x1a8] sm:$0xff]
      %v539 = vld [vmem:[%s4 + $0x1b0] sm:$0xff]
      %v540 = vld [vmem:[%s4 + $0x1b8] sm:$0xff]
      %v541 = vld [vmem:[%s4 + $0x1c0] sm:$0xff]
      %v542 = vld [vmem:[%s4 + $0x1c8] sm:$0xff]
      %v543 = vld [vmem:[%s4 + $0x1d0] sm:$0xff]
      %v544 = vld [vmem:[%s4 + $0x1d8] sm:$0xff]
      %v546 = vsel %vm395, %v484, 0
      %548 = vmatpush.msra.mxu0 %v530
      %549 = vmatpush.msra.mxu0 %v527
      %550 = vmatpush.msra.mxu0 %v524
      %551 = vmatpush.msra.mxu0 %v521
      %552 = vmatpush.msra.mxu0 %v518
      %553 = vmatpush.msra.mxu0 %v515
      %554 = vmatpush.msra.mxu0 %v512
      %555 = vmatpush.msra.mxu0 %v509
      %556 = vmatpush.msra.mxu0 %v506
      %557 = vmatpush.msra.mxu0 %v503
      %558 = vmatpush.msra.mxu0 %v500
      %559 = vmatpush.msra.mxu0 %v497
      %560 = vmatpush.msra.mxu0 %v494
      %561 = vmatpush.msra.mxu0 %v491
      %562 = vmatpush.msra.mxu0 %v488
      %563 = vmatpush.msra.mxu0 %v485
      %564 = vmatmul.f32.gmra.mxu0 %v483
      %v565 = vpop.f32.mrf.mxu0
      %v566 = vadd.f32 0.0, %v565
      %567 = vdwg.mxu0
      %568 = vmatpush.msra.mxu0 0.0
      %569 = vmatpush.msra.mxu0 0.0
      %570 = vmatpush.msra.mxu0 0.0
      %571 = vmatpush.msra.mxu0 0.0
      %572 = vmatpush.msra.mxu0 0.0
      %573 = vmatpush.msra.mxu0 0.0
      %574 = vmatpush.msra.mxu0 0.0
      %575 = vmatpush.msra.mxu0 0.0
      %576 = vmatpush.msra.mxu0 0.0
      %577 = vmatpush.msra.mxu0 0.0
      %578 = vmatpush.msra.mxu0 0.0
      %579 = vmatpush.msra.mxu0 0.0
      %580 = vmatpush.msra.mxu0 %v542
      %581 = vmatpush.msra.mxu0 %v539
      %582 = vmatpush.msra.mxu0 %v536
      %583 = vmatpush.msra.mxu0 %v533
      %584 = vmatmul.f32.gmra.mxu0 %v546
      %v585 = vpop.f32.mrf.mxu0
      %v586 = vadd.f32 %v566, %v585
      %587 = vdwg.mxu0
      %588 = vmatpush.msra.mxu0 %v531
      %589 = vmatpush.msra.mxu0 %v528
      %590 = vmatpush.msra.mxu0 %v525
      %591 = vmatpush.msra.mxu0 %v522
      %592 = vmatpush.msra.mxu0 %v519
      %593 = vmatpush.msra.mxu0 %v516
      %594 = vmatpush.msra.mxu0 %v513
      %595 = vmatpush.msra.mxu0 %v510
      %596 = vmatpush.msra.mxu0 %v507
      %597 = vmatpush.msra.mxu0 %v504
      %598 = vmatpush.msra.mxu0 %v501
      %599 = vmatpush.msra.mxu0 %v498
      %600 = vmatpush.msra.mxu0 %v495
      %601 = vmatpush.msra.mxu0 %v492
      %602 = vmatpush.msra.mxu0 %v489
      %603 = vmatpush.msra.mxu0 %v486
      %604 = vmatmul.f32.gmra.mxu0 %v483
      %v605 = vpop.f32.mrf.mxu0
      %v606 = vadd.f32 0.0, %v605
      %607 = vdwg.mxu0
      %608 = vmatpush.msra.mxu0 0.0
      %609 = vmatpush.msra.mxu0 0.0
      %610 = vmatpush.msra.mxu0 0.0
      %611 = vmatpush.msra.mxu0 0.0
      %612 = vmatpush.msra.mxu0 0.0
      %613 = vmatpush.msra.mxu0 0.0
      %614 = vmatpush.msra.mxu0 0.0
      %615 = vmatpush.msra.mxu0 0.0
      %616 = vmatpush.msra.mxu0 0.0
      %617 = vmatpush.msra.mxu0 0.0
      %618 = vmatpush.msra.mxu0 0.0
      %619 = vmatpush.msra.mxu0 0.0
      %620 = vmatpush.msra.mxu0 %v543
      %621 = vmatpush.msra.mxu0 %v540
      %622 = vmatpush.msra.mxu0 %v537
      %623 = vmatpush.msra.mxu0 %v534
      %624 = vmatmul.f32.gmra.mxu0 %v546
      %v625 = vpop.f32.mrf.mxu0
      %v626 = vadd.f32 %v606, %v625
      %627 = vdwg.mxu0
      %628 = vmatpush.msra.mxu0 %v532
      %629 = vmatpush.msra.mxu0 %v529
      %630 = vmatpush.msra.mxu0 %v526
      %631 = vmatpush.msra.mxu0 %v523
      %632 = vmatpush.msra.mxu0 %v520
      %633 = vmatpush.msra.mxu0 %v517
      %634 = vmatpush.msra.mxu0 %v514
      %635 = vmatpush.msra.mxu0 %v511
      %636 = vmatpush.msra.mxu0 %v508
      %637 = vmatpush.msra.mxu0 %v505
      %638 = vmatpush.msra.mxu0 %v502
      %639 = vmatpush.msra.mxu0 %v499
      %640 = vmatpush.msra.mxu0 %v496
      %641 = vmatpush.msra.mxu0 %v493
      %642 = vmatpush.msra.mxu0 %v490
      %643 = vmatpush.msra.mxu0 %v487
      %644 = vmatmul.f32.gmra.mxu0 %v483
      %v645 = vpop.f32.mrf.mxu0
      %v646 = vadd.f32 0.0, %v645
      %647 = vdwg.mxu0
      %648 = vmatpush.msra.mxu0 0.0
      %649 = vmatpush.msra.mxu0 0.0
      %650 = vmatpush.msra.mxu0 0.0
      %651 = vmatpush.msra.mxu0 0.0
      %652 = vmatpush.msra.mxu0 0.0
      %653 = vmatpush.msra.mxu0 0.0
      %654 = vmatpush.msra.mxu0 0.0
      %655 = vmatpush.msra.mxu0 0.0
      %656 = vmatpush.msra.mxu0 0.0
      %657 = vmatpush.msra.mxu0 0.0
      %658 = vmatpush.msra.mxu0 0.0
      %659 = vmatpush.msra.mxu0 0.0
      %660 = vmatpush.msra.mxu0 %v544
      %661 = vmatpush.msra.mxu0 %v541
      %662 = vmatpush.msra.mxu0 %v538
      %663 = vmatpush.msra.mxu0 %v535
      %664 = vmatmul.f32.gmra.mxu0 %v546
      %v665 = vpop.f32.mrf.mxu0
      %v666 = vadd.f32 %v646, %v665
      %667 = vdwg.mxu0
      %vm668 = vcmp.gt.f32.partialorder %v586, 0.0
      %vm669 = vcmp.gt.f32.partialorder %v626, 0.0
      %vm670 = vcmp.gt.f32.partialorder %v666, 0.0
      %v671 = vmul.f32 %v586, 0.2
      %v672 = vmul.f32 %v626, 0.2
      %v673 = vmul.f32 %v666, 0.2
      %v674 = vsel %vm668, %v586, %v671
      %v675 = vsel %vm669, %v626, %v672
      %v676 = vsel %vm670, %v666, %v673
      %v677 = vld [vmem:[%s5] sm:$0xff]
      %v678 = vld [vmem:[%s5 + $0x8] sm:$0xff]
      %v679 = vld [vmem:[%s5 + $0x10] sm:$0xff]
      %v680 = vld [vmem:[%s5 + $0x18] sm:$0xff]
      %v681 = vld [vmem:[%s5 + $0x20] sm:$0xff]
      %v682 = vld [vmem:[%s5 + $0x28] sm:$0xff]
      %v683 = vld [vmem:[%s5 + $0x30] sm:$0xff]
      %v684 = vld [vmem:[%s5 + $0x38] sm:$0xff]
      %v685 = vld [vmem:[%s5 + $0x40] sm:$0xff]
      %v686 = vld [vmem:[%s5 + $0x48] sm:$0xff]
      %v687 = vld [vmem:[%s5 + $0x50] sm:$0xff]
      %v688 = vld [vmem:[%s5 + $0x58] sm:$0xff]
      %v689 = vld [vmem:[%s5 + $0x60] sm:$0xff]
      %v690 = vld [vmem:[%s5 + $0x68] sm:$0xff]
      %v691 = vld [vmem:[%s5 + $0x70] sm:$0xff]
      %v692 = vld [vmem:[%s5 + $0x78] sm:$0xff]
      %v693 = vld [vmem:[%s5 + $0x80] sm:$0xff]
      %v694 = vld [vmem:[%s5 + $0x88] sm:$0xff]
      %v695 = vld [vmem:[%s5 + $0x90] sm:$0xff]
      %v696 = vld [vmem:[%s5 + $0x98] sm:$0xff]
      %v697 = vld [vmem:[%s5 + $0xa0] sm:$0xff]
      %v698 = vld [vmem:[%s5 + $0xa8] sm:$0xff]
      %v699 = vld [vmem:[%s5 + $0xb0] sm:$0xff]
      %v700 = vld [vmem:[%s5 + $0xb8] sm:$0xff]
      %v701 = vld [vmem:[%s5 + $0xc0] sm:$0xff]
      %v702 = vld [vmem:[%s5 + $0xc8] sm:$0xff]
      %v703 = vld [vmem:[%s5 + $0xd0] sm:$0xff]
      %v704 = vld [vmem:[%s5 + $0xd8] sm:$0xff]
      %v705 = vld [vmem:[%s5 + $0xe0] sm:$0xff]
      %v706 = vld [vmem:[%s5 + $0xe8] sm:$0xff]
      %v707 = vld [vmem:[%s5 + $0xf0] sm:$0xff]
      %v708 = vld [vmem:[%s5 + $0xf8] sm:$0xff]
      %v709 = vld [vmem:[%s5 + $0x100] sm:$0xff]
      %v710 = vld [vmem:[%s5 + $0x108] sm:$0xff]
      %v711 = vld [vmem:[%s5 + $0x110] sm:$0xff]
      %v712 = vld [vmem:[%s5 + $0x118] sm:$0xff]
      %v713 = vld [vmem:[%s5 + $0x120] sm:$0xff]
      %v714 = vld [vmem:[%s5 + $0x128] sm:$0xff]
      %v715 = vld [vmem:[%s5 + $0x130] sm:$0xff]
      %v716 = vld [vmem:[%s5 + $0x138] sm:$0xff]
      %v717 = vld [vmem:[%s5 + $0x140] sm:$0xff]
      %v718 = vld [vmem:[%s5 + $0x148] sm:$0xff]
      %v719 = vld [vmem:[%s5 + $0x150] sm:$0xff]
      %v720 = vld [vmem:[%s5 + $0x158] sm:$0xff]
      %v721 = vld [vmem:[%s5 + $0x160] sm:$0xff]
      %v722 = vld [vmem:[%s5 + $0x168] sm:$0xff]
      %v723 = vld [vmem:[%s5 + $0x170] sm:$0xff]
      %v724 = vld [vmem:[%s5 + $0x178] sm:$0xff]
      %v725 = vld [vmem:[%s5 + $0x180] sm:$0xff]
      %v726 = vld [vmem:[%s5 + $0x188] sm:$0xff]
      %v727 = vld [vmem:[%s5 + $0x190] sm:$0xff]
      %v728 = vld [vmem:[%s5 + $0x198] sm:$0xff]
      %v729 = vld [vmem:[%s5 + $0x1a0] sm:$0xff]
      %v730 = vld [vmem:[%s5 + $0x1a8] sm:$0xff]
      %v731 = vld [vmem:[%s5 + $0x1b0] sm:$0xff]
      %v732 = vld [vmem:[%s5 + $0x1b8] sm:$0xff]
      %v733 = vld [vmem:[%s5 + $0x1c0] sm:$0xff]
      %v734 = vld [vmem:[%s5 + $0x1c8] sm:$0xff]
      %v735 = vld [vmem:[%s5 + $0x1d0] sm:$0xff]
      %v736 = vld [vmem:[%s5 + $0x1d8] sm:$0xff]
      %v737 = vld [vmem:[%s5 + $0x1e0] sm:$0xff]
      %v738 = vld [vmem:[%s5 + $0x1e8] sm:$0xff]
      %v739 = vld [vmem:[%s5 + $0x1f0] sm:$0xff]
      %v740 = vld [vmem:[%s5 + $0x1f8] sm:$0xff]
      %v741 = vld [vmem:[%s5 + $0x200] sm:$0xff]
      %v742 = vld [vmem:[%s5 + $0x208] sm:$0xff]
      %v743 = vld [vmem:[%s5 + $0x210] sm:$0xff]
      %v744 = vld [vmem:[%s5 + $0x218] sm:$0xff]
      %v745 = vld [vmem:[%s5 + $0x220] sm:$0xff]
      %v746 = vld [vmem:[%s5 + $0x228] sm:$0xff]
      %v747 = vld [vmem:[%s5 + $0x230] sm:$0xff]
      %v748 = vld [vmem:[%s5 + $0x238] sm:$0xff]
      %v749 = vld [vmem:[%s5 + $0x240] sm:$0xff]
      %v750 = vld [vmem:[%s5 + $0x248] sm:$0xff]
      %v751 = vld [vmem:[%s5 + $0x250] sm:$0xff]
      %v752 = vld [vmem:[%s5 + $0x258] sm:$0xff]
      %v753 = vld [vmem:[%s5 + $0x260] sm:$0xff]
      %v754 = vld [vmem:[%s5 + $0x268] sm:$0xff]
      %v755 = vld [vmem:[%s5 + $0x270] sm:$0xff]
      %v756 = vld [vmem:[%s5 + $0x278] sm:$0xff]
      %v758 = vsel %vm258, %v676, 0
      %760 = vmatpush.msra.mxu0 %v707
      %761 = vmatpush.msra.mxu0 %v705
      %762 = vmatpush.msra.mxu0 %v703
      %763 = vmatpush.msra.mxu0 %v701
      %764 = vmatpush.msra.mxu0 %v699
      %765 = vmatpush.msra.mxu0 %v697
      %766 = vmatpush.msra.mxu0 %v695
      %767 = vmatpush.msra.mxu0 %v693
      %768 = vmatpush.msra.mxu0 %v691
      %769 = vmatpush.msra.mxu0 %v689
      %770 = vmatpush.msra.mxu0 %v687
      %771 = vmatpush.msra.mxu0 %v685
      %772 = vmatpush.msra.mxu0 %v683
      %773 = vmatpush.msra.mxu0 %v681
      %774 = vmatpush.msra.mxu0 %v679
      %775 = vmatpush.msra.mxu0 %v677
      %776 = vmatmul.f32.gmra.mxu0 %v674
      %v777 = vpop.f32.mrf.mxu0
      %v778 = vadd.f32 0.0, %v777
      %779 = vdwg.mxu0
      %780 = vmatpush.msra.mxu0 %v739
      %781 = vmatpush.msra.mxu0 %v737
      %782 = vmatpush.msra.mxu0 %v735
      %783 = vmatpush.msra.mxu0 %v733
      %784 = vmatpush.msra.mxu0 %v731
      %785 = vmatpush.msra.mxu0 %v729
      %786 = vmatpush.msra.mxu0 %v727
      %787 = vmatpush.msra.mxu0 %v725
      %788 = vmatpush.msra.mxu0 %v723
      %789 = vmatpush.msra.mxu0 %v721
      %790 = vmatpush.msra.mxu0 %v719
      %791 = vmatpush.msra.mxu0 %v717
      %792 = vmatpush.msra.mxu0 %v715
      %793 = vmatpush.msra.mxu0 %v713
      %794 = vmatpush.msra.mxu0 %v711
      %795 = vmatpush.msra.mxu0 %v709
      %796 = vmatmul.f32.gmra.mxu0 %v675
      %v797 = vpop.f32.mrf.mxu0
      %v798 = vadd.f32 %v778, %v797
      %799 = vdwg.mxu0
      %800 = vmatpush.msra.mxu0 0.0
      %801 = vmatpush.msra.mxu0 0.0
      %802 = vmatpush.msra.mxu0 0.0
      %803 = vmatpush.msra.mxu0 0.0
      %804 = vmatpush.msra.mxu0 0.0
      %805 = vmatpush.msra.mxu0 0.0
      %806 = vmatpush.msra.mxu0 0.0
      %807 = vmatpush.msra.mxu0 0.0
      %808 = vmatpush.msra.mxu0 %v755
      %809 = vmatpush.msra.mxu0 %v753
      %810 = vmatpush.msra.mxu0 %v751
      %811 = vmatpush.msra.mxu0 %v749
      %812 = vmatpush.msra.mxu0 %v747
      %813 = vmatpush.msra.mxu0 %v745
      %814 = vmatpush.msra.mxu0 %v743
      %815 = vmatpush.msra.mxu0 %v741
      %816 = vmatmul.f32.gmra.mxu0 %v758
      %v817 = vpop.f32.mrf.mxu0
      %v818 = vadd.f32 %v798, %v817
      %819 = vdwg.mxu0
      %820 = vmatpush.msra.mxu0 %v708
      %821 = vmatpush.msra.mxu0 %v706
      %822 = vmatpush.msra.mxu0 %v704
      %823 = vmatpush.msra.mxu0 %v702
      %824 = vmatpush.msra.mxu0 %v700
      %825 = vmatpush.msra.mxu0 %v698
      %826 = vmatpush.msra.mxu0 %v696
      %827 = vmatpush.msra.mxu0 %v694
      %828 = vmatpush.msra.mxu0 %v692
      %829 = vmatpush.msra.mxu0 %v690
      %830 = vmatpush.msra.mxu0 %v688
      %831 = vmatpush.msra.mxu0 %v686
      %832 = vmatpush.msra.mxu0 %v684
      %833 = vmatpush.msra.mxu0 %v682
      %834 = vmatpush.msra.mxu0 %v680
      %835 = vmatpush.msra.mxu0 %v678
      %836 = vmatmul.f32.gmra.mxu0 %v674
      %v837 = vpop.f32.mrf.mxu0
      %v838 = vadd.f32 0.0, %v837
      %839 = vdwg.mxu0
      %840 = vmatpush.msra.mxu0 %v740
      %841 = vmatpush.msra.mxu0 %v738
      %842 = vmatpush.msra.mxu0 %v736
      %843 = vmatpush.msra.mxu0 %v734
      %844 = vmatpush.msra.mxu0 %v732
      %845 = vmatpush.msra.mxu0 %v730
      %846 = vmatpush.msra.mxu0 %v728
      %847 = vmatpush.msra.mxu0 %v726
      %848 = vmatpush.msra.mxu0 %v724
      %849 = vmatpush.msra.mxu0 %v722
      %850 = vmatpush.msra.mxu0 %v720
      %851 = vmatpush.msra.mxu0 %v718
      %852 = vmatpush.msra.mxu0 %v716
      %853 = vmatpush.msra.mxu0 %v714
      %854 = vmatpush.msra.mxu0 %v712
      %855 = vmatpush.msra.mxu0 %v710
      %856 = vmatmul.f32.gmra.mxu0 %v675
      %v857 = vpop.f32.mrf.mxu0
      %v858 = vadd.f32 %v838, %v857
      %859 = vdwg.mxu0
      %860 = vmatpush.msra.mxu0 0.0
      %861 = vmatpush.msra.mxu0 0.0
      %862 = vmatpush.msra.mxu0 0.0
      %863 = vmatpush.msra.mxu0 0.0
      %864 = vmatpush.msra.mxu0 0.0
      %865 = vmatpush.msra.mxu0 0.0
      %866 = vmatpush.msra.mxu0 0.0
      %867 = vmatpush.msra.mxu0 0.0
      %868 = vmatpush.msra.mxu0 %v756
      %869 = vmatpush.msra.mxu0 %v754
      %870 = vmatpush.msra.mxu0 %v752
      %871 = vmatpush.msra.mxu0 %v750
      %872 = vmatpush.msra.mxu0 %v748
      %873 = vmatpush.msra.mxu0 %v746
      %874 = vmatpush.msra.mxu0 %v744
      %875 = vmatpush.msra.mxu0 %v742
      %876 = vmatmul.f32.gmra.mxu0 %v758
      %v877 = vpop.f32.mrf.mxu0
      %v878 = vadd.f32 %v858, %v877
      %879 = vdwg.mxu0
      %v880 = vtanh.pop %v818
      %v881 = vtanh.pop %v878
      %882 = vst [vmem:[%s248] sm:$0xff] %v880
      %883 = vst.msk [vmem:[%s248 + $0x8] sm:$0xff] %vm395, %v881
      %p884 = scmp.lt.s32.totalorder %s17, 1
      %s885 = scalar_select %p884, %s17, 1
      %s886 = smul.addr %s885, 2
      %s887 = smul.addr %s886, 8
      %s888 = scalar_lea.vmem %s6, %s887
      // Predicated region
      $region45: #{decoder_forward.1} parent=43 // pred_check
        %p889 = pneg %p166
      $region46: #{decoder_forward.1} parent=43 // pred_check_branch
        %891 = sbr.rel (%p889) target = $region48
      $region47: #{decoder_forward.1} parent=43 // pred_region
        _
      $region48: #{decoder_forward.1} parent=43 // pred_fallthru
        _
    $region44: #{decoder_forward.1} parent=5 // pred_fallthru
      _
    %p892 = scmp.le.s32.totalorder 2, %s12
    // Predicated region
    $region49: #{decoder_forward.1} parent=5 // pred_check
      %p893 = pneg %p892
    $region50: #{decoder_forward.1} parent=5 // pred_check_branch
      %895 = sbr.rel (%p893) target = $region52
    $region51: #{decoder_forward.1} parent=5 // pred_region
      %s896 = ssub.s32 %s12, 2
      // Predicated region
      $region53: #{decoder_forward.1} parent=51 // pred_check
        %p897 = pneg %p172
      $region54: #{decoder_forward.1} parent=51 // pred_check_branch
        %899 = sbr.rel (%p897) target = $region56
      $region55: #{decoder_forward.1} parent=51 // pred_region
        %p900 = scmp.lt.s32.totalorder %s18, 1
        %s901 = scalar_select %p900, %s18, 1
        %s902 = smul.addr %s901, 2
        %s903 = smul.addr %s902, 8
        %s904 = scalar_lea.vmem %s6, %s903
      $region56: #{decoder_forward.1} parent=51 // pred_fallthru
        _
    $region52: #{decoder_forward.1} parent=5 // pred_fallthru
      _
  $region6: #{decoder_forward.1} parent=0 // loop_footer
    %s16 = sadd.s32 1, %s12
  $region7: #{decoder_forward.1} parent=0 // loop_footer_branch
    %11 = sbr.rel target = $region3
  $region8: #{decoder_forward.1} parent=0 // loop_exit
    _

</llo_original>
